<compile_context>
chip_gen: v5e
topology: v5e:2x2
jax: 0.10.0
libtpu: 0.0.40
codegen_flags: <defaults>
</compile_context>

<pallas_src>
import numpy as np
import jax
import jax.numpy as jnp
from jax import lax
from jax.experimental import pallas as pl
from jax.experimental.pallas import tpu as pltpu

# Projection matrix from the PyTorch module (p_mat in projection()).
_P_MAT = ((0.0, 0.0, 1.0),
          (-0.00160981, 0.0, 0.517798),
          (0.0, -0.00160981, 0.390396))

# Landmark ids used by the module: point1 <- 42, point2 <- 36, point3 <- 48.
_LM_IDS = (42, 36, 48)

_CHUNK = 128   # lane-aligned gather chunk width


def headpose_estimation(img, depth_img, facial_landmark):
    # TODO(synk): the PyTorch forward calls cv2.imread(img); file I/O has no
    # Pallas equivalent and the RGB image is never used in the math -> ignored.
    del img
    H, W = depth_img.shape
    chunk_w = min(_CHUNK, W)
    aligned = (W % chunk_w == 0)

    # --- wrapper-side index prep (keeps the kernel's scalar prologue minimal) ---
    # TODO(synk): original code parses landmarks from string slices
    # (facial_landmark[i][0:3] / [4:]); here landmarks are numeric (x, y) coords.
    lm = jnp.asarray(facial_landmark, jnp.float32)
    ids = jnp.asarray(_LM_IDS, jnp.int32)
    xy = lm[ids]                                          # (3, 2) -> (x, y) per point
    # int() truncation like the reference; clamp to stay in-bounds for the DMA
    # (reference does no clamping -> behavior diverges only for OOB landmarks).
    ix = jnp.clip(xy[:, 0].astype(jnp.int32), 0, W - 1)
    iy = jnp.clip(xy[:, 1].astype(jnp.int32), 0, H - 1)
    cstart = jnp.clip((ix // chunk_w) * chunk_w, 0, W - chunk_w)
    off = ix - cstart
    xy_flat = xy.reshape(-1)                              # (6,)  f32 SMEM
    idx_flat = jnp.stack([iy, cstart, off], 1).reshape(-1)  # (9,) i32 SMEM: [iy,cs,off]*3

    def headpose_kernel(xy_ref, idx_ref, depth_ref, out_ref, chunk_buf, sem):
        # --- issue all 3 chunk DMAs first so they overlap --------------------
        copies = []
        for k in range(3):
            row = idx_ref[3 * k]
            cs = idx_ref[3 * k + 1]
            if aligned:
                cs = pl.multiple_of(cs, chunk_w)
            cp = pltpu.make_async_copy(
                depth_ref.at[pl.ds(row, 1), pl.ds(cs, chunk_w)],  # (1, chunk_w) in HBM
                chunk_buf.at[k],                                  # (1, chunk_w) VMEM slot
                sem.at[k])
            cp.start()
            copies.append(cp)

        lane = lax.broadcasted_iota(jnp.int32, (1, chunk_w), 1)   # one vreg, shared

        # --- gather z, project, transform to world ----------------------------
        world = []
        for k in range(3):
            copies[k].wait()
            loff = idx_ref[3 * k + 2]
            chunk = chunk_buf[k].astype(jnp.float32)              # (1, chunk_w)
            z = jnp.sum(jnp.where(lane == loff, chunk, 0.0),
                        axis=1, keepdims=True)                    # (1, 1)
            x = xy_ref[2 * k]
            y = xy_ref[2 * k + 1]
            xz, yz = x * z, y * z
            # p_mat @ [x*z, y*z, z]^T scaled by 0.001 (unrolled 3x3 matvec)
            px = (_P_MAT[0][0] * xz + _P_MAT[0][1] * yz + _P_MAT[0][2] * z) * 0.001
            py = (_P_MAT[1][0] * xz + _P_MAT[1][1] * yz + _P_MAT[1][2] * z) * 0.001
            pz = (_P_MAT[2][0] * xz + _P_MAT[2][1] * yz + _P_MAT[2][2] * z) * 0.001
            # realsense -> world: R = diag(-1, -1, 1), translation = 0
            world.append((-px, -py, pz))

        p1, p2, p3 = world                                        # ids 42, 36, 48

        # head_pose = cross(point3 - point2, point1 - point2)
        ax, ay, az = p3[0] - p2[0], p3[1] - p2[1], p3[2] - p2[2]
        bx, by, bz = p1[0] - p2[0], p1[1] - p2[1], p1[2] - p2[2]
        nx = ay * bz - az * by
        ny = az * bx - ax * bz
        nz = ax * by - ay * bx

        # lane-dense (1, 128) unmasked store; lanes 0..2 hold the normal
        olane = lax.broadcasted_iota(jnp.int32, out_ref.shape, 1)
        out_ref[...] = jnp.where(olane == 0, nx,
                       jnp.where(olane == 1, ny,
                       jnp.where(olane == 2, nz, 0.0)))

    out = pl.pallas_call(
        headpose_kernel,
        out_shape=jax.ShapeDtypeStruct((1, 128), jnp.float32),
        in_specs=[
            pl.BlockSpec(memory_space=pltpu.MemorySpace.SMEM),   # (6,) landmark floats
            pl.BlockSpec(memory_space=pltpu.MemorySpace.SMEM),   # (9,) int indices
            pl.BlockSpec(memory_space=pl.ANY),                   # depth stays in HBM
        ],
        out_specs=pl.BlockSpec(memory_space=pltpu.MemorySpace.VMEM),
        scratch_shapes=[
            pltpu.VMEM((3, 1, chunk_w), depth_img.dtype),        # 3 gathered chunks
            pltpu.SemaphoreType.DMA((3,)),
        ],
    )(xy_flat, idx_flat, depth_img)                              # depth in native dtype
    return out[0, :3]


def reference_headpose(depth_img, facial_landmark):
    """Pure numpy reference mirroring the PyTorch module's math."""
    depth = np.asarray(depth_img, dtype=np.float64)
    lm = np.asarray(facial_landmark, dtype=np.float64)
    p_mat = np.array(_P_MAT, dtype=np.float64)
    R = np.array([[-1, 0, 0], [0, -1, 0], [0, 0, 1]], dtype=np.float64)

    def get(i):
        x, y = lm[i, 0], lm[i, 1]
        z = depth[int(y), int(x)]
        return np.array([x, y, z])

    def proj_world(p):
        v = np.array([p[0] * p[2], p[1] * p[2], p[2]])
        return R @ ((p_mat @ v) * 0.001)

    p2 = proj_world(get(36))
    p1 = proj_world(get(42))
    p3 = proj_world(get(48))
    return np.cross(p3 - p2, p1 - p2)


if __name__ == "__main__":
    H, W = 64, 256          # small depth image; W lane-friendly (multiple of 128)
    key = jax.random.PRNGKey(0)
    k1, k2, k3 = jax.random.split(key, 3)

    depth_img = jax.random.uniform(k1, (H, W), jnp.float32, 500.0, 2000.0)   # depth in mm
    lm_x = jax.random.uniform(k2, (68, 1), jnp.float32, 0.0, float(W - 1))
    lm_y = jax.random.uniform(k3, (68, 1), jnp.float32, 0.0, float(H - 1))
    facial_landmark = jnp.concatenate([lm_x, lm_y], axis=1)                  # (68, 2) (x, y)
    img = jnp.zeros((H, W, 3), jnp.float32)                                  # unused RGB stand-in

    head_pose = headpose_estimation(img, depth_img, facial_landmark)
    head_pose = jax.block_until_ready(head_pose)

    ref = reference_headpose(np.asarray(depth_img), np.asarray(facial_landmark))
    if not np.allclose(np.asarray(head_pose), ref, rtol=5e-4, atol=1e-5):
        raise AssertionError(f"mismatch: kernel={np.asarray(head_pose)} ref={ref}")
    print("KERNEL_OK")
</pallas_src>

<mosaic_0001>
module attributes {stable_mosaic.version = 11 : i64} {
  func.func @headpose_kernel(%arg0: memref<6xf32, #tpu.memory_space<smem>>, %arg1: memref<9xi32, #tpu.memory_space<smem>>, %arg2: memref<64x256xf32, #tpu.memory_space<any>>, %arg3: memref<1x128xf32, #tpu.memory_space<vmem>>, %arg4: memref<3x1x128xf32, #tpu.memory_space<vmem>>, %arg5: memref<3x!tpu.dma_semaphore, #tpu.memory_space<semaphore_mem>>) attributes {dimension_semantics = [], scalar_prefetch = 0 : i64, scratch_operands = 2 : i64, tpu.core_type = #tpu.core_type<tc>} {
    %c0 = arith.constant 0 : index
    %0 = memref.load %arg1[%c0] : memref<9xi32, #tpu.memory_space<smem>>
    %c1 = arith.constant 1 : index
    %1 = memref.load %arg1[%c1] : memref<9xi32, #tpu.memory_space<smem>>
    %2 = tpu.assume_multiple %1, 128 : i32
    %c0_i32 = arith.constant 0 : i32
    %c0_i32_0 = arith.constant 0 : i32
    %3 = tpu.memref_slice %arg2[%0, %2] : memref<64x256xf32, #tpu.memory_space<any>> -> memref<1x128xf32, #tpu.memory_space<any>>
    %c0_i32_1 = arith.constant 0 : i32
    %c0_i32_2 = arith.constant 0 : i32
    %4 = tpu.memref_slice %arg4[%c0_i32, %c0_i32_1, %c0_i32_2] : memref<3x1x128xf32, #tpu.memory_space<vmem>> -> memref<1x1x128xf32, #tpu.memory_space<vmem>>
    %5 = tpu.memref_squeeze %4 : memref<1x1x128xf32, #tpu.memory_space<vmem>> -> memref<1x128xf32, #tpu.memory_space<vmem>>
    %6 = tpu.memref_slice %arg5[%c0_i32_0] : memref<3x!tpu.dma_semaphore, #tpu.memory_space<semaphore_mem>> -> memref<1x!tpu.dma_semaphore, #tpu.memory_space<semaphore_mem>>
    %7 = tpu.memref_squeeze %6 : memref<1x!tpu.dma_semaphore, #tpu.memory_space<semaphore_mem>> -> memref<!tpu.dma_semaphore, #tpu.memory_space<semaphore_mem>>
    tpu.enqueue_dma source(%3 : memref<1x128xf32, #tpu.memory_space<any>>) target(%5 : memref<1x128xf32, #tpu.memory_space<vmem>>) target_semaphore(%7 : memref<!tpu.dma_semaphore, #tpu.memory_space<semaphore_mem>>)
    %c3 = arith.constant 3 : index
    %8 = memref.load %arg1[%c3] : memref<9xi32, #tpu.memory_space<smem>>
    %c4 = arith.constant 4 : index
    %9 = memref.load %arg1[%c4] : memref<9xi32, #tpu.memory_space<smem>>
    %10 = tpu.assume_multiple %9, 128 : i32
    %c1_i32 = arith.constant 1 : i32
    %c1_i32_3 = arith.constant 1 : i32
    %11 = tpu.memref_slice %arg2[%8, %10] : memref<64x256xf32, #tpu.memory_space<any>> -> memref<1x128xf32, #tpu.memory_space<any>>
    %c0_i32_4 = arith.constant 0 : i32
    %c0_i32_5 = arith.constant 0 : i32
    %12 = tpu.memref_slice %arg4[%c1_i32, %c0_i32_4, %c0_i32_5] : memref<3x1x128xf32, #tpu.memory_space<vmem>> -> memref<1x1x128xf32, #tpu.memory_space<vmem>>
    %13 = tpu.memref_squeeze %12 : memref<1x1x128xf32, #tpu.memory_space<vmem>> -> memref<1x128xf32, #tpu.memory_space<vmem>>
    %14 = tpu.memref_slice %arg5[%c1_i32_3] : memref<3x!tpu.dma_semaphore, #tpu.memory_space<semaphore_mem>> -> memref<1x!tpu.dma_semaphore, #tpu.memory_space<semaphore_mem>>
    %15 = tpu.memref_squeeze %14 : memref<1x!tpu.dma_semaphore, #tpu.memory_space<semaphore_mem>> -> memref<!tpu.dma_semaphore, #tpu.memory_space<semaphore_mem>>
    tpu.enqueue_dma source(%11 : memref<1x128xf32, #tpu.memory_space<any>>) target(%13 : memref<1x128xf32, #tpu.memory_space<vmem>>) target_semaphore(%15 : memref<!tpu.dma_semaphore, #tpu.memory_space<semaphore_mem>>)
    %c6 = arith.constant 6 : index
    %16 = memref.load %arg1[%c6] : memref<9xi32, #tpu.memory_space<smem>>
    %c7 = arith.constant 7 : index
    %17 = memref.load %arg1[%c7] : memref<9xi32, #tpu.memory_space<smem>>
    %18 = tpu.assume_multiple %17, 128 : i32
    %c2_i32 = arith.constant 2 : i32
    %c2_i32_6 = arith.constant 2 : i32
    %19 = tpu.memref_slice %arg2[%16, %18] : memref<64x256xf32, #tpu.memory_space<any>> -> memref<1x128xf32, #tpu.memory_space<any>>
    %c0_i32_7 = arith.constant 0 : i32
    %c0_i32_8 = arith.constant 0 : i32
    %20 = tpu.memref_slice %arg4[%c2_i32, %c0_i32_7, %c0_i32_8] : memref<3x1x128xf32, #tpu.memory_space<vmem>> -> memref<1x1x128xf32, #tpu.memory_space<vmem>>
    %21 = tpu.memref_squeeze %20 : memref<1x1x128xf32, #tpu.memory_space<vmem>> -> memref<1x128xf32, #tpu.memory_space<vmem>>
    %22 = tpu.memref_slice %arg5[%c2_i32_6] : memref<3x!tpu.dma_semaphore, #tpu.memory_space<semaphore_mem>> -> memref<1x!tpu.dma_semaphore, #tpu.memory_space<semaphore_mem>>
    %23 = tpu.memref_squeeze %22 : memref<1x!tpu.dma_semaphore, #tpu.memory_space<semaphore_mem>> -> memref<!tpu.dma_semaphore, #tpu.memory_space<semaphore_mem>>
    tpu.enqueue_dma source(%19 : memref<1x128xf32, #tpu.memory_space<any>>) target(%21 : memref<1x128xf32, #tpu.memory_space<vmem>>) target_semaphore(%23 : memref<!tpu.dma_semaphore, #tpu.memory_space<semaphore_mem>>)
    %24 = tpu.iota {dimensions = array<i32: 1>} : vector<1x128xi32>
    %c0_i32_9 = arith.constant 0 : i32
    %c0_i32_10 = arith.constant 0 : i32
    %25 = tpu.memref_slice %arg2[%0, %2] : memref<64x256xf32, #tpu.memory_space<any>> -> memref<1x128xf32, #tpu.memory_space<any>>
    %c0_i32_11 = arith.constant 0 : i32
    %c0_i32_12 = arith.constant 0 : i32
    %26 = tpu.memref_slice %arg4[%c0_i32_9, %c0_i32_11, %c0_i32_12] : memref<3x1x128xf32, #tpu.memory_space<vmem>> -> memref<1x1x128xf32, #tpu.memory_space<vmem>>
    %27 = tpu.memref_squeeze %26 : memref<1x1x128xf32, #tpu.memory_space<vmem>> -> memref<1x128xf32, #tpu.memory_space<vmem>>
    %28 = tpu.memref_slice %arg5[%c0_i32_10] : memref<3x!tpu.dma_semaphore, #tpu.memory_space<semaphore_mem>> -> memref<1x!tpu.dma_semaphore, #tpu.memory_space<semaphore_mem>>
    %29 = tpu.memref_squeeze %28 : memref<1x!tpu.dma_semaphore, #tpu.memory_space<semaphore_mem>> -> memref<!tpu.dma_semaphore, #tpu.memory_space<semaphore_mem>>
    tpu.wait_dma2 semaphore(%29 : memref<!tpu.dma_semaphore, #tpu.memory_space<semaphore_mem>>) src(%25 : memref<1x128xf32, #tpu.memory_space<any>>) dst(%27 : memref<1x128xf32, #tpu.memory_space<vmem>>)
    %c2 = arith.constant 2 : index
    %30 = memref.load %arg1[%c2] : memref<9xi32, #tpu.memory_space<smem>>
    %c0_13 = arith.constant 0 : index
    %c0_14 = arith.constant 0 : index
    %c0_15 = arith.constant 0 : index
    %31 = vector.load %arg4[%c0_13, %c0_14, %c0_15] : memref<3x1x128xf32, #tpu.memory_space<vmem>>, vector<1x1x128xf32>
    %32 = vector.shape_cast %31 : vector<1x1x128xf32> to vector<1x128xf32>
    %33 = vector.broadcast %30 : i32 to vector<1x128xi32>
    %34 = arith.cmpi eq, %24, %33 : vector<1x128xi32>
    %cst = arith.constant 0.000000e+00 : f32
    %35 = vector.broadcast %cst : f32 to vector<1x128xf32>
    %36 = arith.select %34, %32, %35 : vector<1x128xi1>, vector<1x128xf32>
    %cst_16 = arith.constant dense<0.000000e+00> : vector<1xf32>
    %37 = vector.multi_reduction <add>, %36, %cst_16 [1] : vector<1x128xf32> to vector<1xf32>
    %38 = vector.shape_cast %37 : vector<1xf32> to vector<1x1xf32>
    %c0_17 = arith.constant 0 : index
    %39 = memref.load %arg0[%c0_17] : memref<6xf32, #tpu.memory_space<smem>>
    %c1_18 = arith.constant 1 : index
    %40 = memref.load %arg0[%c1_18] : memref<6xf32, #tpu.memory_space<smem>>
    %41 = vector.broadcast %39 : f32 to vector<1x1xf32>
    %42 = arith.mulf %41, %38 : vector<1x1xf32>
    %43 = vector.broadcast %40 : f32 to vector<1x1xf32>
    %44 = arith.mulf %43, %38 : vector<1x1xf32>
    %cst_19 = arith.constant 0.000000e+00 : f32
    %45 = vector.broadcast %cst_19 : f32 to vector<1x1xf32>
    %46 = arith.mulf %45, %42 : vector<1x1xf32>
    %cst_20 = arith.constant 0.000000e+00 : f32
    %47 = vector.broadcast %cst_20 : f32 to vector<1x1xf32>
    %48 = arith.mulf %47, %44 : vector<1x1xf32>
    %49 = arith.addf %46, %48 : vector<1x1xf32>
    %cst_21 = arith.constant 1.000000e+00 : f32
    %50 = vector.broadcast %cst_21 : f32 to vector<1x1xf32>
    %51 = arith.mulf %50, %38 : vector<1x1xf32>
    %52 = arith.addf %49, %51 : vector<1x1xf32>
    %cst_22 = arith.constant 1.000000e-03 : f32
    %53 = vector.broadcast %cst_22 : f32 to vector<1x1xf32>
    %54 = arith.mulf %52, %53 : vector<1x1xf32>
    %cst_23 = arith.constant -1.609810e-03 : f32
    %55 = vector.broadcast %cst_23 : f32 to vector<1x1xf32>
    %56 = arith.mulf %55, %42 : vector<1x1xf32>
    %cst_24 = arith.constant 0.000000e+00 : f32
    %57 = vector.broadcast %cst_24 : f32 to vector<1x1xf32>
    %58 = arith.mulf %57, %44 : vector<1x1xf32>
    %59 = arith.addf %56, %58 : vector<1x1xf32>
    %cst_25 = arith.constant 5.177980e-01 : f32
    %60 = vector.broadcast %cst_25 : f32 to vector<1x1xf32>
    %61 = arith.mulf %60, %38 : vector<1x1xf32>
    %62 = arith.addf %59, %61 : vector<1x1xf32>
    %cst_26 = arith.constant 1.000000e-03 : f32
    %63 = vector.broadcast %cst_26 : f32 to vector<1x1xf32>
    %64 = arith.mulf %62, %63 : vector<1x1xf32>
    %cst_27 = arith.constant 0.000000e+00 : f32
    %65 = vector.broadcast %cst_27 : f32 to vector<1x1xf32>
    %66 = arith.mulf %65, %42 : vector<1x1xf32>
    %cst_28 = arith.constant -1.609810e-03 : f32
    %67 = vector.broadcast %cst_28 : f32 to vector<1x1xf32>
    %68 = arith.mulf %67, %44 : vector<1x1xf32>
    %69 = arith.addf %66, %68 : vector<1x1xf32>
    %cst_29 = arith.constant 3.903960e-01 : f32
    %70 = vector.broadcast %cst_29 : f32 to vector<1x1xf32>
    %71 = arith.mulf %70, %38 : vector<1x1xf32>
    %72 = arith.addf %69, %71 : vector<1x1xf32>
    %cst_30 = arith.constant 1.000000e-03 : f32
    %73 = vector.broadcast %cst_30 : f32 to vector<1x1xf32>
    %74 = arith.mulf %72, %73 : vector<1x1xf32>
    %cst_31 = arith.constant 0.000000e+00 : f32
    %75 = vector.broadcast %cst_31 : f32 to vector<1x1xf32>
    %76 = arith.subf %75, %54 : vector<1x1xf32>
    %cst_32 = arith.constant 0.000000e+00 : f32
    %77 = vector.broadcast %cst_32 : f32 to vector<1x1xf32>
    %78 = arith.subf %77, %64 : vector<1x1xf32>
    %c1_i32_33 = arith.constant 1 : i32
    %c1_i32_34 = arith.constant 1 : i32
    %79 = tpu.memref_slice %arg2[%8, %10] : memref<64x256xf32, #tpu.memory_space<any>> -> memref<1x128xf32, #tpu.memory_space<any>>
    %c0_i32_35 = arith.constant 0 : i32
    %c0_i32_36 = arith.constant 0 : i32
    %80 = tpu.memref_slice %arg4[%c1_i32_33, %c0_i32_35, %c0_i32_36] : memref<3x1x128xf32, #tpu.memory_space<vmem>> -> memref<1x1x128xf32, #tpu.memory_space<vmem>>
    %81 = tpu.memref_squeeze %80 : memref<1x1x128xf32, #tpu.memory_space<vmem>> -> memref<1x128xf32, #tpu.memory_space<vmem>>
    %82 = tpu.memref_slice %arg5[%c1_i32_34] : memref<3x!tpu.dma_semaphore, #tpu.memory_space<semaphore_mem>> -> memref<1x!tpu.dma_semaphore, #tpu.memory_space<semaphore_mem>>
    %83 = tpu.memref_squeeze %82 : memref<1x!tpu.dma_semaphore, #tpu.memory_space<semaphore_mem>> -> memref<!tpu.dma_semaphore, #tpu.memory_space<semaphore_mem>>
    tpu.wait_dma2 semaphore(%83 : memref<!tpu.dma_semaphore, #tpu.memory_space<semaphore_mem>>) src(%79 : memref<1x128xf32, #tpu.memory_space<any>>) dst(%81 : memref<1x128xf32, #tpu.memory_space<vmem>>)
    %c5 = arith.constant 5 : index
    %84 = memref.load %arg1[%c5] : memref<9xi32, #tpu.memory_space<smem>>
    %c1_37 = arith.constant 1 : index
    %c0_38 = arith.constant 0 : index
    %c0_39 = arith.constant 0 : index
    %85 = vector.load %arg4[%c1_37, %c0_38, %c0_39] : memref<3x1x128xf32, #tpu.memory_space<vmem>>, vector<1x1x128xf32>
    %86 = vector.shape_cast %85 : vector<1x1x128xf32> to vector<1x128xf32>
    %87 = vector.broadcast %84 : i32 to vector<1x128xi32>
    %88 = arith.cmpi eq, %24, %87 : vector<1x128xi32>
    %cst_40 = arith.constant 0.000000e+00 : f32
    %89 = vector.broadcast %cst_40 : f32 to vector<1x128xf32>
    %90 = arith.select %88, %86, %89 : vector<1x128xi1>, vector<1x128xf32>
    %cst_41 = arith.constant dense<0.000000e+00> : vector<1xf32>
    %91 = vector.multi_reduction <add>, %90, %cst_41 [1] : vector<1x128xf32> to vector<1xf32>
    %92 = vector.shape_cast %91 : vector<1xf32> to vector<1x1xf32>
    %c2_42 = arith.constant 2 : index
    %93 = memref.load %arg0[%c2_42] : memref<6xf32, #tpu.memory_space<smem>>
    %c3_43 = arith.constant 3 : index
    %94 = memref.load %arg0[%c3_43] : memref<6xf32, #tpu.memory_space<smem>>
    %95 = vector.broadcast %93 : f32 to vector<1x1xf32>
    %96 = arith.mulf %95, %92 : vector<1x1xf32>
    %97 = vector.broadcast %94 : f32 to vector<1x1xf32>
    %98 = arith.mulf %97, %92 : vector<1x1xf32>
    %cst_44 = arith.constant 0.000000e+00 : f32
    %99 = vector.broadcast %cst_44 : f32 to vector<1x1xf32>
    %100 = arith.mulf %99, %96 : vector<1x1xf32>
    %cst_45 = arith.constant 0.000000e+00 : f32
    %101 = vector.broadcast %cst_45 : f32 to vector<1x1xf32>
    %102 = arith.mulf %101, %98 : vector<1x1xf32>
    %103 = arith.addf %100, %102 : vector<1x1xf32>
    %cst_46 = arith.constant 1.000000e+00 : f32
    %104 = vector.broadcast %cst_46 : f32 to vector<1x1xf32>
    %105 = arith.mulf %104, %92 : vector<1x1xf32>
    %106 = arith.addf %103, %105 : vector<1x1xf32>
    %cst_47 = arith.constant 1.000000e-03 : f32
    %107 = vector.broadcast %cst_47 : f32 to vector<1x1xf32>
    %108 = arith.mulf %106, %107 : vector<1x1xf32>
    %cst_48 = arith.constant -1.609810e-03 : f32
    %109 = vector.broadcast %cst_48 : f32 to vector<1x1xf32>
    %110 = arith.mulf %109, %96 : vector<1x1xf32>
    %cst_49 = arith.constant 0.000000e+00 : f32
    %111 = vector.broadcast %cst_49 : f32 to vector<1x1xf32>
    %112 = arith.mulf %111, %98 : vector<1x1xf32>
    %113 = arith.addf %110, %112 : vector<1x1xf32>
    %cst_50 = arith.constant 5.177980e-01 : f32
    %114 = vector.broadcast %cst_50 : f32 to vector<1x1xf32>
    %115 = arith.mulf %114, %92 : vector<1x1xf32>
    %116 = arith.addf %113, %115 : vector<1x1xf32>
    %cst_51 = arith.constant 1.000000e-03 : f32
    %117 = vector.broadcast %cst_51 : f32 to vector<1x1xf32>
    %118 = arith.mulf %116, %117 : vector<1x1xf32>
    %cst_52 = arith.constant 0.000000e+00 : f32
    %119 = vector.broadcast %cst_52 : f32 to vector<1x1xf32>
    %120 = arith.mulf %119, %96 : vector<1x1xf32>
    %cst_53 = arith.constant -1.609810e-03 : f32
    %121 = vector.broadcast %cst_53 : f32 to vector<1x1xf32>
    %122 = arith.mulf %121, %98 : vector<1x1xf32>
    %123 = arith.addf %120, %122 : vector<1x1xf32>
    %cst_54 = arith.constant 3.903960e-01 : f32
    %124 = vector.broadcast %cst_54 : f32 to vector<1x1xf32>
    %125 = arith.mulf %124, %92 : vector<1x1xf32>
    %126 = arith.addf %123, %125 : vector<1x1xf32>
    %cst_55 = arith.constant 1.000000e-03 : f32
    %127 = vector.broadcast %cst_55 : f32 to vector<1x1xf32>
    %128 = arith.mulf %126, %127 : vector<1x1xf32>
    %cst_56 = arith.constant 0.000000e+00 : f32
    %129 = vector.broadcast %cst_56 : f32 to vector<1x1xf32>
    %130 = arith.subf %129, %108 : vector<1x1xf32>
    %cst_57 = arith.constant 0.000000e+00 : f32
    %131 = vector.broadcast %cst_57 : f32 to vector<1x1xf32>
    %132 = arith.subf %131, %118 : vector<1x1xf32>
    %c2_i32_58 = arith.constant 2 : i32
    %c2_i32_59 = arith.constant 2 : i32
    %133 = tpu.memref_slice %arg2[%16, %18] : memref<64x256xf32, #tpu.memory_space<any>> -> memref<1x128xf32, #tpu.memory_space<any>>
    %c0_i32_60 = arith.constant 0 : i32
    %c0_i32_61 = arith.constant 0 : i32
    %134 = tpu.memref_slice %arg4[%c2_i32_58, %c0_i32_60, %c0_i32_61] : memref<3x1x128xf32, #tpu.memory_space<vmem>> -> memref<1x1x128xf32, #tpu.memory_space<vmem>>
    %135 = tpu.memref_squeeze %134 : memref<1x1x128xf32, #tpu.memory_space<vmem>> -> memref<1x128xf32, #tpu.memory_space<vmem>>
    %136 = tpu.memref_slice %arg5[%c2_i32_59] : memref<3x!tpu.dma_semaphore, #tpu.memory_space<semaphore_mem>> -> memref<1x!tpu.dma_semaphore, #tpu.memory_space<semaphore_mem>>
    %137 = tpu.memref_squeeze %136 : memref<1x!tpu.dma_semaphore, #tpu.memory_space<semaphore_mem>> -> memref<!tpu.dma_semaphore, #tpu.memory_space<semaphore_mem>>
    tpu.wait_dma2 semaphore(%137 : memref<!tpu.dma_semaphore, #tpu.memory_space<semaphore_mem>>) src(%133 : memref<1x128xf32, #tpu.memory_space<any>>) dst(%135 : memref<1x128xf32, #tpu.memory_space<vmem>>)
    %c8 = arith.constant 8 : index
    %138 = memref.load %arg1[%c8] : memref<9xi32, #tpu.memory_space<smem>>
    %c2_62 = arith.constant 2 : index
    %c0_63 = arith.constant 0 : index
    %c0_64 = arith.constant 0 : index
    %139 = vector.load %arg4[%c2_62, %c0_63, %c0_64] : memref<3x1x128xf32, #tpu.memory_space<vmem>>, vector<1x1x128xf32>
    %140 = vector.shape_cast %139 : vector<1x1x128xf32> to vector<1x128xf32>
    %141 = vector.broadcast %138 : i32 to vector<1x128xi32>
    %142 = arith.cmpi eq, %24, %141 : vector<1x128xi32>
    %cst_65 = arith.constant 0.000000e+00 : f32
    %143 = vector.broadcast %cst_65 : f32 to vector<1x128xf32>
    %144 = arith.select %142, %140, %143 : vector<1x128xi1>, vector<1x128xf32>
    %cst_66 = arith.constant dense<0.000000e+00> : vector<1xf32>
    %145 = vector.multi_reduction <add>, %144, %cst_66 [1] : vector<1x128xf32> to vector<1xf32>
    %146 = vector.shape_cast %145 : vector<1xf32> to vector<1x1xf32>
    %c4_67 = arith.constant 4 : index
    %147 = memref.load %arg0[%c4_67] : memref<6xf32, #tpu.memory_space<smem>>
    %c5_68 = arith.constant 5 : index
    %148 = memref.load %arg0[%c5_68] : memref<6xf32, #tpu.memory_space<smem>>
    %149 = vector.broadcast %147 : f32 to vector<1x1xf32>
    %150 = arith.mulf %149, %146 : vector<1x1xf32>
    %151 = vector.broadcast %148 : f32 to vector<1x1xf32>
    %152 = arith.mulf %151, %146 : vector<1x1xf32>
    %cst_69 = arith.constant 0.000000e+00 : f32
    %153 = vector.broadcast %cst_69 : f32 to vector<1x1xf32>
    %154 = arith.mulf %153, %150 : vector<1x1xf32>
    %cst_70 = arith.constant 0.000000e+00 : f32
    %155 = vector.broadcast %cst_70 : f32 to vector<1x1xf32>
    %156 = arith.mulf %155, %152 : vector<1x1xf32>
    %157 = arith.addf %154, %156 : vector<1x1xf32>
    %cst_71 = arith.constant 1.000000e+00 : f32
    %158 = vector.broadcast %cst_71 : f32 to vector<1x1xf32>
    %159 = arith.mulf %158, %146 : vector<1x1xf32>
    %160 = arith.addf %157, %159 : vector<1x1xf32>
    %cst_72 = arith.constant 1.000000e-03 : f32
    %161 = vector.broadcast %cst_72 : f32 to vector<1x1xf32>
    %162 = arith.mulf %160, %161 : vector<1x1xf32>
    %cst_73 = arith.constant -1.609810e-03 : f32
    %163 = vector.broadcast %cst_73 : f32 to vector<1x1xf32>
    %164 = arith.mulf %163, %150 : vector<1x1xf32>
    %cst_74 = arith.constant 0.000000e+00 : f32
    %165 = vector.broadcast %cst_74 : f32 to vector<1x1xf32>
    %166 = arith.mulf %165, %152 : vector<1x1xf32>
    %167 = arith.addf %164, %166 : vector<1x1xf32>
    %cst_75 = arith.constant 5.177980e-01 : f32
    %168 = vector.broadcast %cst_75 : f32 to vector<1x1xf32>
    %169 = arith.mulf %168, %146 : vector<1x1xf32>
    %170 = arith.addf %167, %169 : vector<1x1xf32>
    %cst_76 = arith.constant 1.000000e-03 : f32
    %171 = vector.broadcast %cst_76 : f32 to vector<1x1xf32>
    %172 = arith.mulf %170, %171 : vector<1x1xf32>
    %cst_77 = arith.constant 0.000000e+00 : f32
    %173 = vector.broadcast %cst_77 : f32 to vector<1x1xf32>
    %174 = arith.mulf %173, %150 : vector<1x1xf32>
    %cst_78 = arith.constant -1.609810e-03 : f32
    %175 = vector.broadcast %cst_78 : f32 to vector<1x1xf32>
    %176 = arith.mulf %175, %152 : vector<1x1xf32>
    %177 = arith.addf %174, %176 : vector<1x1xf32>
    %cst_79 = arith.constant 3.903960e-01 : f32
    %178 = vector.broadcast %cst_79 : f32 to vector<1x1xf32>
    %179 = arith.mulf %178, %146 : vector<1x1xf32>
    %180 = arith.addf %177, %179 : vector<1x1xf32>
    %cst_80 = arith.constant 1.000000e-03 : f32
    %181 = vector.broadcast %cst_80 : f32 to vector<1x1xf32>
    %182 = arith.mulf %180, %181 : vector<1x1xf32>
    %cst_81 = arith.constant 0.000000e+00 : f32
    %183 = vector.broadcast %cst_81 : f32 to vector<1x1xf32>
    %184 = arith.subf %183, %162 : vector<1x1xf32>
    %cst_82 = arith.constant 0.000000e+00 : f32
    %185 = vector.broadcast %cst_82 : f32 to vector<1x1xf32>
    %186 = arith.subf %185, %172 : vector<1x1xf32>
    %187 = arith.subf %184, %130 : vector<1x1xf32>
    %188 = arith.subf %186, %132 : vector<1x1xf32>
    %189 = arith.subf %182, %128 : vector<1x1xf32>
    %190 = arith.subf %76, %130 : vector<1x1xf32>
    %191 = arith.subf %78, %132 : vector<1x1xf32>
    %192 = arith.subf %74, %128 : vector<1x1xf32>
    %193 = arith.mulf %188, %192 : vector<1x1xf32>
    %194 = arith.mulf %189, %191 : vector<1x1xf32>
    %195 = arith.subf %193, %194 : vector<1x1xf32>
    %196 = arith.mulf %189, %190 : vector<1x1xf32>
    %197 = arith.mulf %187, %192 : vector<1x1xf32>
    %198 = arith.subf %196, %197 : vector<1x1xf32>
    %199 = arith.mulf %187, %191 : vector<1x1xf32>
    %200 = arith.mulf %188, %190 : vector<1x1xf32>
    %201 = arith.subf %199, %200 : vector<1x1xf32>
    %202 = tpu.iota {dimensions = array<i32: 1>} : vector<1x128xi32>
    %c0_i32_83 = arith.constant 0 : i32
    %203 = vector.broadcast %c0_i32_83 : i32 to vector<1x128xi32>
    %204 = arith.cmpi eq, %202, %203 : vector<1x128xi32>
    %c1_i32_84 = arith.constant 1 : i32
    %205 = vector.broadcast %c1_i32_84 : i32 to vector<1x128xi32>
    %206 = arith.cmpi eq, %202, %205 : vector<1x128xi32>
    %c2_i32_85 = arith.constant 2 : i32
    %207 = vector.broadcast %c2_i32_85 : i32 to vector<1x128xi32>
    %208 = arith.cmpi eq, %202, %207 : vector<1x128xi32>
    %cst_86 = arith.constant 0.000000e+00 : f32
    %209 = vector.shape_cast %201 : vector<1x1xf32> to vector<1x1xf32>
    %210 = vector.broadcast %209 : vector<1x1xf32> to vector<1x128xf32>
    %211 = vector.broadcast %cst_86 : f32 to vector<1x128xf32>
    %212 = arith.select %208, %210, %211 : vector<1x128xi1>, vector<1x128xf32>
    %213 = vector.shape_cast %198 : vector<1x1xf32> to vector<1x1xf32>
    %214 = vector.broadcast %213 : vector<1x1xf32> to vector<1x128xf32>
    %215 = arith.select %206, %214, %212 : vector<1x128xi1>, vector<1x128xf32>
    %216 = vector.shape_cast %195 : vector<1x1xf32> to vector<1x1xf32>
    %217 = vector.broadcast %216 : vector<1x1xf32> to vector<1x128xf32>
    %218 = arith.select %204, %217, %215 : vector<1x128xi1>, vector<1x128xf32>
    %c0_87 = arith.constant 0 : index
    %c0_88 = arith.constant 0 : index
    %219 = vector.load %arg3[%c0_87, %c0_88] : memref<1x128xf32, #tpu.memory_space<vmem>>, vector<1x128xf32>
    tpu.vector_store %arg3[%c0_87, %c0_88], %218 {strides = array<i32>} : memref<1x128xf32, #tpu.memory_space<vmem>>, vector<1x128xf32>,
    return
  }
}

</mosaic_0001>

<llo_original>
// kernel: tpu_custom_call.1
$region0: #{tpu_custom_call.1}
  #allocation0 [shape = 'u32[]', space=smem, size = 0x4, offset = 0x4, fixed_abs, tag = 'smem constant byte address 0x4 - core index']
  #allocation1 [shape = 'u32[72,128]{1,0:T(1,128)}', space=vmem, size = 0x9000, scoped, tag = 'internal scratch']
  #allocation2 [shape = 'f32[3,1,128]{2,1,0:T(1,128)}', space=vmem, size = 0x600, scoped, tag = 'scratch operand']
  #allocation3 [shape = 's32[3]{0}', space=sflag, size = 0xc, scoped, tag = 'scratch operand']
  #allocation10 [shape = 's32[]', space=sflag, size = 0x4, offset = 0, fixed_abs, tag = 'sflag constant byte address 0x0 - dummy sync flag']
  #allocation11 [shape = 's32[]', space=sflag, size = 0x4, offset = 0, fixed_abs, tag = 'sflag constant byte address 0x0 - dummy sync flag']
  #allocation12 [shape = 'u32[]', space=smem, size = 0x4, offset = 0x44, fixed_abs, tag = 'smem constant byte address 0x44 - assertion arg 0']
  #allocation13 [shape = 'u32[]', space=smem, size = 0x4, offset = 0x48, fixed_abs, tag = 'smem constant byte address 0x48 - assertion arg 1']
  #allocation14 [shape = 's32[]', space=sflag, size = 0x4, offset = 0, fixed_abs, tag = 'sflag constant byte address 0x0 - dummy sync flag']
  #allocation15 [shape = 's32[]', space=sflag, size = 0x4, offset = 0, fixed_abs, tag = 'sflag constant byte address 0x0 - dummy sync flag']
  #allocation16 [shape = 's32[]', space=sflag, size = 0x4, offset = 0, fixed_abs, tag = 'sflag constant byte address 0x0 - dummy sync flag']
  #allocation17 [shape = 's32[]', space=sflag, size = 0x4, offset = 0, fixed_abs, tag = 'sflag constant byte address 0x0 - dummy sync flag']
  %s0 = inlined_call_operand.hbm [shape: f32[6], index: 0, kind: input, shape index: {}]
  %s1 = inlined_call_operand.hbm [shape: s32[9], index: 1, kind: input, shape index: {}]
  %s2 = inlined_call_operand.hbm [shape: f32[64,256], index: 2, kind: input, shape index: {}]
  %s3 = inlined_call_operand.hbm [shape: f32[1,128], index: 3, kind: output, shape index: {}]
  %s4 = sld [smem:[#allocation0]]
  $region38: #{tpu_custom_call.1} parent=0
    _
  %s6 = ssub.s32 1, %s4
  %s7 = scalar_select 0, %s6, %s4
  $region1: #{tpu_custom_call.1} parent=0
    #allocation4 [shape = 'u8[512]{0}', space=smem, size = 0x200, scoped, tag = 'input window, operand 0, single buffered']
    #allocation5 [shape = 's32[1]{0}', space=sflag, size = 0x4, scoped, tag = 'scoped memory for tpu_custom_call.1']
    #allocation6 [shape = 's32[1]{0}', space=sflag, size = 0x4, scoped, tag = 'scoped memory for tpu_custom_call.1']
    #allocation7 [shape = 'u8[512]{0}', space=smem, size = 0x200, scoped, tag = 'input window, operand 1, single buffered']
    #allocation8 [shape = 's32[1]{0}', space=sflag, size = 0x4, scoped, tag = 'scoped memory for tpu_custom_call.1']
    #allocation9 [shape = 'u8[512]{0}', space=vmem, size = 0x400, scoped, tag = 'output window, operand 0, single buffered']
    %8 = vsyncpa [#allocation6], 0
    %9 = vsyncpa [#allocation8], 0
    %10 = vsyncpa [#allocation5], 0
    // Predicated region
    $region2: #{tpu_custom_call.1} parent=1 // pred_check
      _
    $region3: #{tpu_custom_call.1} parent=1 // pred_check_branch
      %12 = sbr.rel (0) target = $region5
    $region4: #{tpu_custom_call.1} parent=1 // pred_region
      %14 = vsyncadd [#allocation6], 0
      %s16 = sshll.u32 %s0, 4
      %s17 = int_to_ptr.hbm [resolvable:$true] %s16
      %19 = dma.hbm_to_smem %s17, 16, [#allocation4], [#allocation6]
    $region5: #{tpu_custom_call.1} parent=1 // pred_fallthru
      _
    // Predicated region
    $region6: #{tpu_custom_call.1} parent=1 // pred_check
      _
    $region7: #{tpu_custom_call.1} parent=1 // pred_check_branch
      %21 = sbr.rel (0) target = $region9
    $region8: #{tpu_custom_call.1} parent=1 // pred_region
      %23 = vsyncadd [#allocation8], 0
      %s25 = sshll.u32 %s1, 4
      %s26 = int_to_ptr.hbm [resolvable:$true] %s25
      %28 = dma.hbm_to_smem %s26, 16, [#allocation7], [#allocation8]
    $region9: #{tpu_custom_call.1} parent=1 // pred_fallthru
      _
    // Predicated region
    $region10: #{tpu_custom_call.1} parent=1 // pred_check
      _
    $region11: #{tpu_custom_call.1} parent=1 // pred_check_branch
      %30 = sbr.rel (0) target = $region13
    $region12: #{tpu_custom_call.1} parent=1 // pred_region
      %32 = dma.done [#allocation6], 16
    $region13: #{tpu_custom_call.1} parent=1 // pred_fallthru
      _
    // Predicated region
    $region14: #{tpu_custom_call.1} parent=1 // pred_check
      _
    $region15: #{tpu_custom_call.1} parent=1 // pred_check_branch
      %34 = sbr.rel (0) target = $region17
    $region16: #{tpu_custom_call.1} parent=1 // pred_region
      %36 = dma.done [#allocation8], 16
    $region17: #{tpu_custom_call.1} parent=1 // pred_fallthru
      _
    %37 = sfence
    %s38 = sld [smem:[#allocation7]]
    %s39 = sld [smem:[#allocation7 + $0x1]]
    %s40 = sshrl.u32 %s38, 3
    %s41 = sand.u32 %s38, 7
    %s42 = smul.u32 %s40, 16
    %s43 = sadd.s32 %s41, %s42
    %s44 = sshra.s32 %s39, 7
    %s45 = sand.u32 %s39, 127
    %s46 = smul.u32 %s44, 8
    %s47 = sadd.s32 %s46, %s43
    %s48 = scalar_lea.hbm %s2, %s47
    // Predicated region
    $region18: #{tpu_custom_call.1} parent=1 // pred_check
      _
    $region19: #{tpu_custom_call.1} parent=1 // pred_check_branch
      %50 = sbr.rel target = $region21
    $region20: #{tpu_custom_call.1} parent=1 // pred_region
      %51 = sst [smem:[#allocation12]] [#allocation11]
      %52 = sst [smem:[#allocation13]] [#allocation10]
    $region21: #{tpu_custom_call.1} parent=1 // pred_fallthru
      _
    %54 = shalt.err (0)
    %s56 = sshll.u32 %s48, 4
    %s57 = int_to_ptr.hbm [resolvable:$true] %s56
    %s58 = sshll.u32 [#allocation2], 4
    %s59 = int_to_ptr.vmem [resolvable:$true] %s58
    %61 = dma.hbm_to_vmem [thread:$0]  %s57, 16, %s59, [#allocation3]
    %s62 = sld [smem:[#allocation7 + $0x3]]
    %s63 = sld [smem:[#allocation7 + $0x4]]
    %s64 = sshrl.u32 %s62, 3
    %s65 = sand.u32 %s62, 7
    %s66 = smul.u32 %s64, 16
    %s67 = sadd.s32 %s65, %s66
    %s68 = sshra.s32 %s63, 7
    %s69 = sand.u32 %s63, 127
    %s70 = smul.u32 %s68, 8
    %s71 = sadd.s32 %s70, %s67
    %s72 = scalar_lea.hbm %s2, %s71
    %s73 = scalar_lea.vmem [#allocation2], 1
    %s74 = scalar_lea.sflag [#allocation3], 1
    // Predicated region
    $region22: #{tpu_custom_call.1} parent=1 // pred_check
      _
    $region23: #{tpu_custom_call.1} parent=1 // pred_check_branch
      %76 = sbr.rel target = $region25
    $region24: #{tpu_custom_call.1} parent=1 // pred_region
      %77 = sst [smem:[#allocation12]] [#allocation15]
      %78 = sst [smem:[#allocation13]] [#allocation14]
    $region25: #{tpu_custom_call.1} parent=1 // pred_fallthru
      _
    %80 = shalt.err (0)
    %s82 = sshll.u32 %s72, 4
    %s83 = int_to_ptr.hbm [resolvable:$true] %s82
    %s84 = sshll.u32 %s73, 4
    %s85 = int_to_ptr.vmem [resolvable:$true] %s84
    %87 = dma.hbm_to_vmem [thread:$0]  %s83, 16, %s85, %s74
    %s88 = sld [smem:[#allocation7 + $0x6]]
    %s89 = sld [smem:[#allocation7 + $0x7]]
    %s90 = sshrl.u32 %s88, 3
    %s91 = sand.u32 %s88, 7
    %s92 = smul.u32 %s90, 16
    %s93 = sadd.s32 %s91, %s92
    %s94 = sshra.s32 %s89, 7
    %s95 = sand.u32 %s89, 127
    %s96 = smul.u32 %s94, 8
    %s97 = sadd.s32 %s96, %s93
    %s98 = scalar_lea.hbm %s2, %s97
    %s99 = scalar_lea.vmem [#allocation2], 2
    %s100 = scalar_lea.sflag [#allocation3], 2
    // Predicated region
    $region26: #{tpu_custom_call.1} parent=1 // pred_check
      _
    $region27: #{tpu_custom_call.1} parent=1 // pred_check_branch
      %102 = sbr.rel target = $region29
    $region28: #{tpu_custom_call.1} parent=1 // pred_region
      %103 = sst [smem:[#allocation12]] [#allocation17]
      %104 = sst [smem:[#allocation13]] [#allocation16]
    $region29: #{tpu_custom_call.1} parent=1 // pred_fallthru
      _
    %106 = shalt.err (0)
    %s108 = sshll.u32 %s98, 4
    %s109 = int_to_ptr.hbm [resolvable:$true] %s108
    %s110 = sshll.u32 %s99, 4
    %s111 = int_to_ptr.vmem [resolvable:$true] %s110
    %113 = dma.hbm_to_vmem [thread:$0]  %s109, 16, %s111, %s100
    %v114 = vlaneseq
    %v115 = vand.u32 %v114, 127
    %s116 = smul.u32 1, 1
    %s117 = sshll.u32 %s116, 4
    %118 = dma.done [#allocation3], %s117
    %s119 = sld [smem:[#allocation7 + $0x2]]
    %v120 = vld [vmem:[#allocation2] sm:$0x1]
    %v121 = vstv %s119
    %vm122 = vcmp.eq.s32.totalorder %v115, %v121
    %v123 = vsel %vm122, %v120, 0.0
    %vm124 = vcmask 1040384
    %v125 = vsel %vm124, %v123, 0.0
    %126 = vadd.xlane.f32.xlu0 %v125
    %v127 = vpop.xlane.xlu0 %126
    %s128 = sld [smem:[#allocation4]]
    %s129 = sld [smem:[#allocation4 + $0x1]]
    %v130 = vstv %s128
    %v131 = vmul.f32 %v130, %v127
    %v132 = vstv %s129
    %v133 = vmul.f32 %v132, %v127
    %v134 = vmul.f32 %v131, 0.0
    %v135 = vmul.f32 %v133, 0.0
    %v136 = vadd.f32 %v134, %v135
    %v137 = vadd.f32 %v136, %v127
    %v138 = vmul.f32 %v137, 0.001
    %v139 = vmul.f32 %v131, -0.00160981
    %v140 = vadd.f32 %v139, %v135
    %v141 = vmul.f32 %v127, 0.517798
    %v142 = vadd.f32 %v140, %v141
    %v143 = vmul.f32 %v142, 0.001
    %v144 = vmul.f32 %v133, -0.00160981
    %v145 = vadd.f32 %v134, %v144
    %v146 = vmul.f32 %v127, 0.390396
    %v147 = vadd.f32 %v145, %v146
    %v148 = vmul.f32 %v147, 0.001
    %v149 = vsub.f32 0.0, %v138
    %v150 = vsub.f32 0.0, %v143
    %s151 = sshll.u32 %s116, 4
    %152 = dma.done %s74, %s151
    %s153 = sld [smem:[#allocation7 + $0x5]]
    %v154 = vld [vmem:[%s73] sm:$0x1]
    %v155 = vstv %s153
    %vm156 = vcmp.eq.s32.totalorder %v115, %v155
    %v157 = vsel %vm156, %v154, 0.0
    %v158 = vsel %vm124, %v157, 0.0
    %159 = vadd.xlane.f32.xlu0 %v158
    %v160 = vpop.xlane.xlu0 %159
    %s161 = sld [smem:[#allocation4 + $0x2]]
    %s162 = sld [smem:[#allocation4 + $0x3]]
    %v163 = vstv %s161
    %v164 = vmul.f32 %v163, %v160
    %v165 = vstv %s162
    %v166 = vmul.f32 %v165, %v160
    %v167 = vmul.f32 %v164, 0.0
    %v168 = vmul.f32 %v166, 0.0
    %v169 = vadd.f32 %v167, %v168
    %v170 = vadd.f32 %v169, %v160
    %v171 = vmul.f32 %v170, 0.001
    %v172 = vmul.f32 %v164, -0.00160981
    %v173 = vadd.f32 %v172, %v168
    %v174 = vmul.f32 %v160, 0.517798
    %v175 = vadd.f32 %v173, %v174
    %v176 = vmul.f32 %v175, 0.001
    %v177 = vmul.f32 %v166, -0.00160981
    %v178 = vadd.f32 %v167, %v177
    %v179 = vmul.f32 %v160, 0.390396
    %v180 = vadd.f32 %v178, %v179
    %v181 = vmul.f32 %v180, 0.001
    %v182 = vsub.f32 0.0, %v171
    %v183 = vsub.f32 0.0, %v176
    %s184 = sshll.u32 %s116, 4
    %185 = dma.done %s100, %s184
    %s186 = sld [smem:[#allocation7 + $0x8]]
    %v187 = vld [vmem:[%s99] sm:$0x1]
    %v188 = vstv %s186
    %vm189 = vcmp.eq.s32.totalorder %v115, %v188
    %v190 = vsel %vm189, %v187, 0.0
    %v191 = vsel %vm124, %v190, 0.0
    %192 = vadd.xlane.f32.xlu0 %v191
    %v193 = vpop.xlane.xlu0 %192
    %s194 = sld [smem:[#allocation4 + $0x4]]
    %s195 = sld [smem:[#allocation4 + $0x5]]
    %v196 = vstv %s194
    %v197 = vmul.f32 %v196, %v193
    %v198 = vstv %s195
    %v199 = vmul.f32 %v198, %v193
    %v200 = vmul.f32 %v197, 0.0
    %v201 = vmul.f32 %v199, 0.0
    %v202 = vadd.f32 %v200, %v201
    %v203 = vadd.f32 %v202, %v193
    %v204 = vmul.f32 %v203, 0.001
    %v205 = vmul.f32 %v197, -0.00160981
    %v206 = vadd.f32 %v205, %v201
    %v207 = vmul.f32 %v193, 0.517798
    %v208 = vadd.f32 %v206, %v207
    %v209 = vmul.f32 %v208, 0.001
    %v210 = vmul.f32 %v199, -0.00160981
    %v211 = vadd.f32 %v200, %v210
    %v212 = vmul.f32 %v193, 0.390396
    %v213 = vadd.f32 %v211, %v212
    %v214 = vmul.f32 %v213, 0.001
    %v215 = vsub.f32 0.0, %v204
    %v216 = vsub.f32 0.0, %v209
    %v217 = vsub.f32 %v215, %v182
    %v218 = vsub.f32 %v216, %v183
    %v219 = vsub.f32 %v214, %v181
    %v220 = vsub.f32 %v149, %v182
    %v221 = vsub.f32 %v150, %v183
    %v222 = vsub.f32 %v148, %v181
    %v223 = vmul.f32 %v218, %v222
    %v224 = vmul.f32 %v219, %v221
    %v225 = vsub.f32 %v223, %v224
    %v226 = vmul.f32 %v219, %v220
    %v227 = vmul.f32 %v217, %v222
    %v228 = vsub.f32 %v226, %v227
    %v229 = vmul.f32 %v217, %v221
    %v230 = vmul.f32 %v218, %v220
    %v231 = vsub.f32 %v229, %v230
    %vm232 = vcmp.eq.s32.totalorder %v115, 0
    %vm233 = vcmp.eq.s32.totalorder %v115, 1
    %vm234 = vcmp.eq.s32.totalorder %v115, 2
    %v235 = vsel %vm234, %v231, 0.0
    %v236 = vsel %vm233, %v228, %v235
    %v237 = vsel %vm232, %v225, %v236
    %238 = vst [vmem:[#allocation9] sm:$0x1] %v237
    // Predicated region
    $region30: #{tpu_custom_call.1} parent=1 // pred_check
      _
    $region31: #{tpu_custom_call.1} parent=1 // pred_check_branch
      %240 = sbr.rel (0) target = $region33
    $region32: #{tpu_custom_call.1} parent=1 // pred_region
      %242 = vsyncadd [#allocation5], 0
      %s244 = sshll.u32 [#allocation9], 4
      %s245 = int_to_ptr.vmem [resolvable:$true] %s244
      %s246 = sshll.u32 %s3, 4
      %s247 = int_to_ptr.hbm [resolvable:$true] %s246
      %249 = dma.vmem_to_hbm [thread:$0]  %s245, 16, %s247, [#allocation5]
    $region33: #{tpu_custom_call.1} parent=1 // pred_fallthru
      _
    // Predicated region
    $region34: #{tpu_custom_call.1} parent=1 // pred_check
      _
    $region35: #{tpu_custom_call.1} parent=1 // pred_check_branch
      %251 = sbr.rel (0) target = $region37
    $region36: #{tpu_custom_call.1} parent=1 // pred_region
      %253 = dma.done [#allocation5], 16
    $region37: #{tpu_custom_call.1} parent=1 // pred_fallthru
      _
    %254 = vsyncpa [#allocation5], 1
    %255 = vsyncpa [#allocation6], 1
    %256 = vsyncpa [#allocation8], 1
  %257 = vsyncmov [#allocation3]
  %s258 = vpop.sfrf %257
  %p259 = scmp.eq.s32.totalorder %s258, 0
  %p260 = pneg %p259
  %262 = shalt.err (%p260)
  %s263 = scalar_lea.sflag [#allocation3], 1
  %264 = vsyncmov %s263
  %s265 = vpop.sfrf %264
  %p266 = scmp.eq.s32.totalorder %s265, 0
  %p267 = pneg %p266
  %269 = shalt.err (%p267)
  %s270 = scalar_lea.sflag [#allocation3], 2
  %271 = vsyncmov %s270
  %s272 = vpop.sfrf %271
  %p273 = scmp.eq.s32.totalorder %s272, 0
  %p274 = pneg %p273
  %276 = shalt.err (%p274)

</llo_original>
